<compile_context>
chip_gen: v7x
topology: tpu7x:2x2x1
jax: 0.10.0
libtpu: 0.0.40
codegen_flags: <defaults>
</compile_context>

<pallas_src>
import functools

import jax
import jax.numpy as jnp
from jax.experimental import pallas as pl
from jax.experimental.pallas import tpu as pltpu

LANE = 128                 # TPU lane width; feature dims padded to this
MAX_NODE_TILE = 1024       # big tiles amortize ~0.35us/step overhead (v6e/v7x)


def _round_up(x, m):
    return ((x + m - 1) // m) * m


def _node_padding(n):
    """Return (padded node count, node tile size)."""
    n_pad = _round_up(max(n, LANE), LANE)
    if n_pad <= MAX_NODE_TILE:
        return n_pad, n_pad
    n_pad = _round_up(n_pad, MAX_NODE_TILE)
    return n_pad, MAX_NODE_TILE


@functools.lru_cache(maxsize=1)
def _vmem_budget():
    """Generation-aware VMEM limit (v7x: 64 MiB physical, v5e/v6e: 128 MiB)."""
    try:
        cap = int(pltpu.get_tpu_info().vmem_capacity_bytes)
    except Exception:
        cap = 64 * 1024 * 1024
    return max(min(cap - (16 << 20), 100 << 20), 32 << 20)


# --------------- fused 3-layer kernel (A_hat resident in VMEM) -------------- #

def _fused3_kernel(a_ref, x_ref, w1_ref, b1_ref, w2_ref, b2_ref, w3_ref,
                   b3_ref, o_ref):
    a = a_ref[...]                                            # bf16, read once

    # layer 1: relu(A @ (X @ W1) + b1)
    h = jnp.dot(x_ref[...], w1_ref[...],
                preferred_element_type=jnp.float32).astype(jnp.bfloat16)
    h = jnp.dot(a, h, preferred_element_type=jnp.float32) + b1_ref[...]
    h = jnp.maximum(h, 0.0).astype(jnp.bfloat16)

    # layer 2: relu(A @ (H @ W2) + b2)
    h = jnp.dot(h, w2_ref[...],
                preferred_element_type=jnp.float32).astype(jnp.bfloat16)
    h = jnp.dot(a, h, preferred_element_type=jnp.float32) + b2_ref[...]
    h = jnp.maximum(h, 0.0).astype(jnp.bfloat16)

    # layer 3: A @ (H @ W3) + b3
    h = jnp.dot(h, w3_ref[...],
                preferred_element_type=jnp.float32).astype(jnp.bfloat16)
    o_ref[...] = jnp.dot(a, h, preferred_element_type=jnp.float32) + b3_ref[...]


def _fused3(a_pad, x_pad, pp, *, out_pad, vmem_limit):
    n_pad = a_pad.shape[0]
    return pl.pallas_call(
        _fused3_kernel,
        out_shape=jax.ShapeDtypeStruct((n_pad, out_pad), jnp.float32),
        compiler_params=pltpu.CompilerParams(vmem_limit_bytes=vmem_limit),
    )(a_pad, x_pad, pp["w1"], pp["b1"], pp["w2"], pp["b2"], pp["w3"], pp["b3"])


# ------ streamed per-layer kernel (fused transform + aggregation + bias) ---- #

def _stream_layer_kernel(a_ref, x_ref, w_ref, b_ref, o_ref, acc_ref, *,
                         apply_relu):
    k = pl.program_id(1)

    @pl.when(k == 0)
    def _():
        # init accumulator with the broadcast bias (no extra add at finalize)
        acc_ref[...] = jnp.broadcast_to(b_ref[...], acc_ref.shape)

    # H_k = X_k @ W computed on the fly (W resident) -> H never hits HBM.
    h_k = jnp.dot(x_ref[...], w_ref[...],
                  preferred_element_type=jnp.float32).astype(jnp.bfloat16)
    acc_ref[...] += jnp.dot(a_ref[...], h_k,
                            preferred_element_type=jnp.float32)

    @pl.when(k == pl.num_programs(1) - 1)
    def _():
        out = acc_ref[...]
        if apply_relu:
            out = jnp.maximum(out, 0.0)
        o_ref[...] = out.astype(o_ref.dtype)


def _stream_layer(a_pad, x_bf16, w_bf16, b_f32, *, tm, tk, apply_relu,
                  out_dtype, vmem_limit):
    n_pad = a_pad.shape[0]
    f_in = x_bf16.shape[1]
    f_out = w_bf16.shape[1]
    return pl.pallas_call(
        functools.partial(_stream_layer_kernel, apply_relu=apply_relu),
        out_shape=jax.ShapeDtypeStruct((n_pad, f_out), out_dtype),
        grid_spec=pltpu.PrefetchScalarGridSpec(
            num_scalar_prefetch=0,
            grid=(n_pad // tm, n_pad // tk),
            in_specs=[
                pl.BlockSpec((tm, tk), lambda i, k: (i, k)),       # A_hat tile
                pl.BlockSpec((tk, f_in), lambda i, k: (k, 0)),     # X k-tile
                pl.BlockSpec((f_in, f_out), lambda i, k: (0, 0)),  # W resident
                pl.BlockSpec((1, f_out), lambda i, k: (0, 0)),     # bias
            ],
            out_specs=pl.BlockSpec((tm, f_out), lambda i, k: (i, 0)),
            scratch_shapes=[pltpu.VMEM((tm, f_out), jnp.float32)],
        ),
        compiler_params=pltpu.CompilerParams(
            dimension_semantics=("parallel", "arbitrary"),
            vmem_limit_bytes=vmem_limit,
        ),
    )(a_pad, x_bf16, w_bf16, b_f32)


# ----------------------------- JAX glue / setup ----------------------------- #

def build_norm_adj_padded(edge_index, num_nodes, n_pad):
    """GCN-normalized dense adjacency with self loops, zero-padded, bf16."""
    src, dst = edge_index[0], edge_index[1]
    loop = jnp.arange(num_nodes, dtype=edge_index.dtype)
    src = jnp.concatenate([src, loop])
    dst = jnp.concatenate([dst, loop])
    a = jnp.zeros((n_pad, n_pad), jnp.float32).at[dst, src].add(1.0)
    deg = a.sum(axis=1)
    dinv = jnp.where(deg > 0, jax.lax.rsqrt(deg), 0.0)
    return (dinv[:, None] * a * dinv[None, :]).astype(jnp.bfloat16)


def _pad_weight(w, rows, cols):
    out = jnp.zeros((rows, cols), jnp.float32)
    return out.at[: w.shape[0], : w.shape[1]].set(w).astype(jnp.bfloat16)


def _pad_bias(b, cols):
    return jnp.zeros((1, cols), jnp.float32).at[0, : b.shape[0]].set(b)


def glorot(key, shape):
    fan_in, fan_out = shape
    lim = (6.0 / (fan_in + fan_out)) ** 0.5
    return jax.random.uniform(key, shape, jnp.float32, -lim, lim)


def init_params(key, in_ch, hid_ch, out_ch):
    k1, k2, k3 = jax.random.split(key, 3)
    return {
        "w1": glorot(k1, (in_ch, hid_ch)),  "b1": jnp.zeros((hid_ch,), jnp.float32),
        "w2": glorot(k2, (hid_ch, hid_ch)), "b2": jnp.zeros((hid_ch,), jnp.float32),
        "w3": glorot(k3, (in_ch if False else hid_ch, out_ch)),
        "b3": jnp.zeros((out_ch,), jnp.float32),
    }


def prepare_padded_params(params, in_ch, hid_ch, out_ch):
    """Pad weights/biases to lane-dense shapes once (hoisted out of forward)."""
    f_in_pad = _round_up(max(in_ch, LANE), LANE)
    hid_pad = _round_up(max(hid_ch, LANE), LANE)
    out_pad = _round_up(max(out_ch, LANE), LANE)
    return {
        "w1": _pad_weight(params["w1"], f_in_pad, hid_pad),
        "b1": _pad_bias(params["b1"], hid_pad),
        "w2": _pad_weight(params["w2"], hid_pad, hid_pad),
        "b2": _pad_bias(params["b2"], hid_pad),
        "w3": _pad_weight(params["w3"], hid_pad, out_pad),
        "b3": _pad_bias(params["b3"], out_pad),
    }, (f_in_pad, hid_pad, out_pad)


def make_gcn_forward(num_nodes, in_ch, hid_ch, out_ch):
    """Build a jitted forward fn; fused-vs-streamed path picked at trace time."""
    n_pad, tile = _node_padding(num_nodes)
    f_in_pad = _round_up(max(in_ch, LANE), LANE)
    hid_pad = _round_up(max(hid_ch, LANE), LANE)
    out_pad = _round_up(max(out_ch, LANE), LANE)
    budget = _vmem_budget()

    # Estimate fused-kernel VMEM need: A_hat + X + out + a few activation temps.
    f_max = max(f_in_pad, hid_pad, out_pad)
    fused_need = (n_pad * n_pad * 2          # A_hat bf16
                  + n_pad * f_in_pad * 2     # X bf16
                  + n_pad * out_pad * 4      # output f32
                  + 6 * n_pad * f_max * 4    # activation temps (headroom)
                  + 3 * f_max * f_max * 2)   # weights
    use_fused = fused_need <= int(0.6 * budget)

    @jax.jit
    def forward(pp, x, a_pad):
        x_p = jnp.zeros((n_pad, f_in_pad), jnp.float32)
        x_p = x_p.at[:num_nodes, :in_ch].set(x).astype(jnp.bfloat16)

        if use_fused:
            out = _fused3(a_pad, x_p, pp, out_pad=out_pad, vmem_limit=budget)
        else:
            h = _stream_layer(a_pad, x_p, pp["w1"], pp["b1"], tm=tile, tk=tile,
                              apply_relu=True, out_dtype=jnp.bfloat16,
                              vmem_limit=budget)
            h = _stream_layer(a_pad, h, pp["w2"], pp["b2"], tm=tile, tk=tile,
                              apply_relu=True, out_dtype=jnp.bfloat16,
                              vmem_limit=budget)
            out = _stream_layer(a_pad, h, pp["w3"], pp["b3"], tm=tile, tk=tile,
                                apply_relu=False, out_dtype=jnp.float32,
                                vmem_limit=budget)
        return out[:num_nodes, :out_ch]

    return forward, n_pad


# ---------------------------------- main ------------------------------------ #

if __name__ == "__main__":
    num_nodes, in_ch, hid_ch, out_ch = 16, 8, 32, 4

    key = jax.random.PRNGKey(0)
    kx, kp = jax.random.split(key)

    # node features
    x = jax.random.normal(kx, (num_nodes, in_ch), jnp.float32)

    # deterministic ring graph (both directions): [2, E] with E = 2*N
    idx = jnp.arange(num_nodes, dtype=jnp.int32)
    nxt = (idx + 1) % num_nodes
    edge_index = jnp.stack(
        [jnp.concatenate([idx, nxt]), jnp.concatenate([nxt, idx])], axis=0
    )

    params = init_params(kp, in_ch, hid_ch, out_ch)
    padded_params, _ = prepare_padded_params(params, in_ch, hid_ch, out_ch)

    forward, n_pad = make_gcn_forward(num_nodes, in_ch, hid_ch, out_ch)

    # Graph preprocessing done ONCE (hoisted out of the forward pass).
    a_pad = build_norm_adj_padded(edge_index, num_nodes, n_pad)

    out = forward(padded_params, x, a_pad)
    jax.block_until_ready(out)
    assert out.shape == (num_nodes, out_ch)
    print("KERNEL_OK")
</pallas_src>

<mosaic_0001>
module attributes {stable_mosaic.version = 11 : i64} {
  func.func @_fused3_kernel(%arg0: memref<128x128xbf16, #tpu.memory_space<vmem>>, %arg1: memref<128x128xbf16, #tpu.memory_space<vmem>>, %arg2: memref<128x128xbf16, #tpu.memory_space<vmem>>, %arg3: memref<1x128xf32, #tpu.memory_space<vmem>>, %arg4: memref<128x128xbf16, #tpu.memory_space<vmem>>, %arg5: memref<1x128xf32, #tpu.memory_space<vmem>>, %arg6: memref<128x128xbf16, #tpu.memory_space<vmem>>, %arg7: memref<1x128xf32, #tpu.memory_space<vmem>>, %arg8: memref<128x128xf32, #tpu.memory_space<vmem>>) attributes {dimension_semantics = [], scalar_prefetch = 0 : i64, scratch_operands = 0 : i64, tpu.core_type = #tpu.core_type<tc>} {
    %c0 = arith.constant 0 : index
    %c0_0 = arith.constant 0 : index
    %0 = vector.load %arg0[%c0, %c0_0] : memref<128x128xbf16, #tpu.memory_space<vmem>>, vector<128x128xbf16>
    %c0_1 = arith.constant 0 : index
    %c0_2 = arith.constant 0 : index
    %1 = vector.load %arg1[%c0_1, %c0_2] : memref<128x128xbf16, #tpu.memory_space<vmem>>, vector<128x128xbf16>
    %c0_3 = arith.constant 0 : index
    %c0_4 = arith.constant 0 : index
    %2 = vector.load %arg2[%c0_3, %c0_4] : memref<128x128xbf16, #tpu.memory_space<vmem>>, vector<128x128xbf16>
    %cst = arith.constant dense<0.000000e+00> : vector<128x128xf32>
    %3 = tpu.matmul %1, %2, %cst {dimension_numbers = #tpu.dot_dimension_numbers<[1], [0], [0], [1], [0, 0, 1, 1], [], []>} : vector<128x128xbf16>, vector<128x128xbf16>, vector<128x128xf32> -> vector<128x128xf32>
    %4 = arith.truncf %3 : vector<128x128xf32> to vector<128x128xbf16>
    %cst_5 = arith.constant dense<0.000000e+00> : vector<128x128xf32>
    %5 = tpu.matmul %0, %4, %cst_5 {dimension_numbers = #tpu.dot_dimension_numbers<[1], [0], [0], [1], [0, 0, 1, 1], [], []>} : vector<128x128xbf16>, vector<128x128xbf16>, vector<128x128xf32> -> vector<128x128xf32>
    %c0_6 = arith.constant 0 : index
    %c0_7 = arith.constant 0 : index
    %6 = vector.load %arg3[%c0_6, %c0_7] : memref<1x128xf32, #tpu.memory_space<vmem>>, vector<1x128xf32>
    %7 = vector.broadcast %6 : vector<1x128xf32> to vector<128x128xf32>
    %8 = arith.addf %5, %7 : vector<128x128xf32>
    %cst_8 = arith.constant 0.000000e+00 : f32
    %9 = vector.broadcast %cst_8 : f32 to vector<128x128xf32>
    %10 = arith.maximumf %8, %9 : vector<128x128xf32>
    %11 = arith.truncf %10 : vector<128x128xf32> to vector<128x128xbf16>
    %c0_9 = arith.constant 0 : index
    %c0_10 = arith.constant 0 : index
    %12 = vector.load %arg4[%c0_9, %c0_10] : memref<128x128xbf16, #tpu.memory_space<vmem>>, vector<128x128xbf16>
    %cst_11 = arith.constant dense<0.000000e+00> : vector<128x128xf32>
    %13 = tpu.matmul %11, %12, %cst_11 {dimension_numbers = #tpu.dot_dimension_numbers<[1], [0], [0], [1], [0, 0, 1, 1], [], []>} : vector<128x128xbf16>, vector<128x128xbf16>, vector<128x128xf32> -> vector<128x128xf32>
    %14 = arith.truncf %13 : vector<128x128xf32> to vector<128x128xbf16>
    %cst_12 = arith.constant dense<0.000000e+00> : vector<128x128xf32>
    %15 = tpu.matmul %0, %14, %cst_12 {dimension_numbers = #tpu.dot_dimension_numbers<[1], [0], [0], [1], [0, 0, 1, 1], [], []>} : vector<128x128xbf16>, vector<128x128xbf16>, vector<128x128xf32> -> vector<128x128xf32>
    %c0_13 = arith.constant 0 : index
    %c0_14 = arith.constant 0 : index
    %16 = vector.load %arg5[%c0_13, %c0_14] : memref<1x128xf32, #tpu.memory_space<vmem>>, vector<1x128xf32>
    %17 = vector.broadcast %16 : vector<1x128xf32> to vector<128x128xf32>
    %18 = arith.addf %15, %17 : vector<128x128xf32>
    %cst_15 = arith.constant 0.000000e+00 : f32
    %19 = vector.broadcast %cst_15 : f32 to vector<128x128xf32>
    %20 = arith.maximumf %18, %19 : vector<128x128xf32>
    %21 = arith.truncf %20 : vector<128x128xf32> to vector<128x128xbf16>
    %c0_16 = arith.constant 0 : index
    %c0_17 = arith.constant 0 : index
    %22 = vector.load %arg6[%c0_16, %c0_17] : memref<128x128xbf16, #tpu.memory_space<vmem>>, vector<128x128xbf16>
    %cst_18 = arith.constant dense<0.000000e+00> : vector<128x128xf32>
    %23 = tpu.matmul %21, %22, %cst_18 {dimension_numbers = #tpu.dot_dimension_numbers<[1], [0], [0], [1], [0, 0, 1, 1], [], []>} : vector<128x128xbf16>, vector<128x128xbf16>, vector<128x128xf32> -> vector<128x128xf32>
    %24 = arith.truncf %23 : vector<128x128xf32> to vector<128x128xbf16>
    %cst_19 = arith.constant dense<0.000000e+00> : vector<128x128xf32>
    %25 = tpu.matmul %0, %24, %cst_19 {dimension_numbers = #tpu.dot_dimension_numbers<[1], [0], [0], [1], [0, 0, 1, 1], [], []>} : vector<128x128xbf16>, vector<128x128xbf16>, vector<128x128xf32> -> vector<128x128xf32>
    %c0_20 = arith.constant 0 : index
    %c0_21 = arith.constant 0 : index
    %26 = vector.load %arg7[%c0_20, %c0_21] : memref<1x128xf32, #tpu.memory_space<vmem>>, vector<1x128xf32>
    %27 = vector.broadcast %26 : vector<1x128xf32> to vector<128x128xf32>
    %28 = arith.addf %25, %27 : vector<128x128xf32>
    %c0_22 = arith.constant 0 : index
    %c0_23 = arith.constant 0 : index
    %29 = vector.load %arg8[%c0_22, %c0_23] : memref<128x128xf32, #tpu.memory_space<vmem>>, vector<128x128xf32>
    tpu.vector_store %arg8[%c0_22, %c0_23], %28 {strides = array<i32>} : memref<128x128xf32, #tpu.memory_space<vmem>>, vector<128x128xf32>,
    return
  }
}

</mosaic_0001>

<llo_original>
// kernel: forward.1
$region0: #{forward.1}
  #allocation0 [shape = 'u32[]', space=smem, size = 0x4, offset = 0x4, fixed_abs, tag = 'smem constant byte address 0x4 - core index']
  #allocation1 [shape = 'u32[144,128]{1,0:T(1,128)}', space=vmem, size = 0x12000, scoped, tag = 'internal scratch']
  %s0 = inlined_call_operand.vmem [shape: bf16[128,128], index: 0, kind: input, shape index: {}]
  %s1 = inlined_call_operand.vmem [shape: bf16[128,128], index: 1, kind: input, shape index: {}]
  %s2 = inlined_call_operand.hbm [shape: bf16[128,128], index: 2, kind: input, shape index: {}]
  %s3 = inlined_call_operand.vmem [shape: f32[1,128], index: 3, kind: input, shape index: {}]
  %s4 = inlined_call_operand.hbm [shape: bf16[128,128], index: 4, kind: input, shape index: {}]
  %s5 = inlined_call_operand.vmem [shape: f32[1,128], index: 5, kind: input, shape index: {}]
  %s6 = inlined_call_operand.hbm [shape: bf16[128,128], index: 6, kind: input, shape index: {}]
  %s7 = inlined_call_operand.vmem [shape: f32[1,128], index: 7, kind: input, shape index: {}]
  %s8 = inlined_call_operand.vmem [shape: f32[128,128], index: 8, kind: output, shape index: {}]
  %s9 = sld [smem:[#allocation0]]
  $region54: #{forward.1} parent=0
    _
  %s11 = ssub.s32 1, %s9
  %s12 = scalar_select 0, %s11, %s9
  $region1: #{forward.1} parent=0
    #allocation2 [shape = 'u8[32768]{0}', space=vmem, size = 0x8000, scoped, tag = 'input window, operand 2, single buffered']
    #allocation3 [shape = 's32[1]{0}', space=sflag, size = 0x4, scoped, tag = 'scoped memory for forward.1']
    #allocation4 [shape = 'u8[32768]{0}', space=vmem, size = 0x8000, scoped, tag = 'input window, operand 4, single buffered']
    #allocation5 [shape = 's32[1]{0}', space=sflag, size = 0x4, scoped, tag = 'scoped memory for forward.1']
    #allocation6 [shape = 'u8[32768]{0}', space=vmem, size = 0x8000, scoped, tag = 'input window, operand 6, single buffered']
    %13 = vsyncpa [#allocation3], 0
    %14 = vsyncpa [#allocation5], 0
    // Predicated region
    $region2: #{forward.1} parent=1 // pred_check
      _
    $region3: #{forward.1} parent=1 // pred_check_branch
      %16 = sbr.rel (0) target = $region5
    $region4: #{forward.1} parent=1 // pred_region
      _
    $region5: #{forward.1} parent=1 // pred_fallthru
      _
    // Predicated region
    $region6: #{forward.1} parent=1 // pred_check
      _
    $region7: #{forward.1} parent=1 // pred_check_branch
      %18 = sbr.rel (0) target = $region9
    $region8: #{forward.1} parent=1 // pred_region
      _
    $region9: #{forward.1} parent=1 // pred_fallthru
      _
    // Predicated region
    $region10: #{forward.1} parent=1 // pred_check
      _
    $region11: #{forward.1} parent=1 // pred_check_branch
      %20 = sbr.rel (0) target = $region13
    $region12: #{forward.1} parent=1 // pred_region
      %s22 = ssub.s32 1024, 1024
      %23 = vsyncadd [#allocation3], %s22
      %s24 = sshll.u32 [#allocation2], 4
      %s25 = int_to_ptr.vmem [resolvable:$true] %s24
      %30 = dma.hbm_to_vmem [thread:$0]  %s2, 1024, %s25, [#allocation3], 64, 64, 4
    $region13: #{forward.1} parent=1 // pred_fallthru
      _
    // Predicated region
    $region14: #{forward.1} parent=1 // pred_check
      _
    $region15: #{forward.1} parent=1 // pred_check_branch
      %32 = sbr.rel (0) target = $region17
    $region16: #{forward.1} parent=1 // pred_region
      _
    $region17: #{forward.1} parent=1 // pred_fallthru
      _
    // Predicated region
    $region18: #{forward.1} parent=1 // pred_check
      _
    $region19: #{forward.1} parent=1 // pred_check_branch
      %34 = sbr.rel (0) target = $region21
    $region20: #{forward.1} parent=1 // pred_region
      %s36 = ssub.s32 1024, 1024
      %37 = vsyncadd [#allocation5], %s36
      %s38 = sshll.u32 [#allocation4], 4
      %s39 = int_to_ptr.vmem [resolvable:$true] %s38
      %44 = dma.hbm_to_vmem [thread:$0]  %s4, 1024, %s39, [#allocation5], 64, 64, 4
    $region21: #{forward.1} parent=1 // pred_fallthru
      _
    // Predicated region
    $region22: #{forward.1} parent=1 // pred_check
      _
    $region23: #{forward.1} parent=1 // pred_check_branch
      %46 = sbr.rel (0) target = $region25
    $region24: #{forward.1} parent=1 // pred_region
      _
    $region25: #{forward.1} parent=1 // pred_fallthru
      _
    // Predicated region
    $region26: #{forward.1} parent=1 // pred_check
      _
    $region27: #{forward.1} parent=1 // pred_check_branch
      %48 = sbr.rel (0) target = $region29
    $region28: #{forward.1} parent=1 // pred_region
      %s50 = ssub.s32 1024, 1024
      %51 = vsyncadd [#allocation5], %s50
      %s52 = sshll.u32 [#allocation6], 4
      %s53 = int_to_ptr.vmem [resolvable:$true] %s52
      %58 = dma.hbm_to_vmem [thread:$0]  %s6, 1024, %s53, [#allocation5], 64, 64, 4
    $region29: #{forward.1} parent=1 // pred_fallthru
      _
    // Predicated region
    $region30: #{forward.1} parent=1 // pred_check
      _
    $region31: #{forward.1} parent=1 // pred_check_branch
      %60 = sbr.rel (0) target = $region33
    $region32: #{forward.1} parent=1 // pred_region
      _
    $region33: #{forward.1} parent=1 // pred_fallthru
      _
    // Predicated region
    $region34: #{forward.1} parent=1 // pred_check
      _
    $region35: #{forward.1} parent=1 // pred_check_branch
      %62 = sbr.rel (0) target = $region37
    $region36: #{forward.1} parent=1 // pred_region
      %63 = dma.done [#allocation3], 1024
    $region37: #{forward.1} parent=1 // pred_fallthru
      _
    // Predicated region
    $region38: #{forward.1} parent=1 // pred_check
      _
    $region39: #{forward.1} parent=1 // pred_check_branch
      %65 = sbr.rel (0) target = $region41
    $region40: #{forward.1} parent=1 // pred_region
      %66 = dma.done [#allocation5], 1024
    $region41: #{forward.1} parent=1 // pred_fallthru
      _
    // Predicated region
    $region42: #{forward.1} parent=1 // pred_check
      _
    $region43: #{forward.1} parent=1 // pred_check_branch
      %68 = sbr.rel (0) target = $region45
    $region44: #{forward.1} parent=1 // pred_region
      %69 = dma.done [#allocation5], 1024
    $region45: #{forward.1} parent=1 // pred_fallthru
      _
    %v71 = vld [vmem:[%s0] sm:$0xf]
    %v72 = vld [vmem:[%s0 + $0x4] sm:$0xf]
    %v73 = vld [vmem:[%s0 + $0x8] sm:$0xf]
    %v74 = vld [vmem:[%s0 + $0xc] sm:$0xf]
    %v75 = vld [vmem:[%s0 + $0x10] sm:$0xf]
    %v76 = vld [vmem:[%s0 + $0x14] sm:$0xf]
    %v77 = vld [vmem:[%s0 + $0x18] sm:$0xf]
    %v78 = vld [vmem:[%s0 + $0x1c] sm:$0xf]
    %v79 = vld [vmem:[%s0 + $0x20] sm:$0xf]
    %v80 = vld [vmem:[%s0 + $0x24] sm:$0xf]
    %v81 = vld [vmem:[%s0 + $0x28] sm:$0xf]
    %v82 = vld [vmem:[%s0 + $0x2c] sm:$0xf]
    %v83 = vld [vmem:[%s0 + $0x30] sm:$0xf]
    %v84 = vld [vmem:[%s0 + $0x34] sm:$0xf]
    %v85 = vld [vmem:[%s0 + $0x38] sm:$0xf]
    %v86 = vld [vmem:[%s0 + $0x3c] sm:$0xf]
    %v87 = vld [vmem:[%s1] sm:$0xf]
    %v88 = vld [vmem:[%s1 + $0x4] sm:$0xf]
    %v89 = vld [vmem:[%s1 + $0x8] sm:$0xf]
    %v90 = vld [vmem:[%s1 + $0xc] sm:$0xf]
    %v91 = vld [vmem:[%s1 + $0x10] sm:$0xf]
    %v92 = vld [vmem:[%s1 + $0x14] sm:$0xf]
    %v93 = vld [vmem:[%s1 + $0x18] sm:$0xf]
    %v94 = vld [vmem:[%s1 + $0x1c] sm:$0xf]
    %v95 = vld [vmem:[%s1 + $0x20] sm:$0xf]
    %v96 = vld [vmem:[%s1 + $0x24] sm:$0xf]
    %v97 = vld [vmem:[%s1 + $0x28] sm:$0xf]
    %v98 = vld [vmem:[%s1 + $0x2c] sm:$0xf]
    %v99 = vld [vmem:[%s1 + $0x30] sm:$0xf]
    %v100 = vld [vmem:[%s1 + $0x34] sm:$0xf]
    %v101 = vld [vmem:[%s1 + $0x38] sm:$0xf]
    %v102 = vld [vmem:[%s1 + $0x3c] sm:$0xf]
    %v103 = vld [vmem:[#allocation2] sm:$0xf]
    %v104 = vld [vmem:[#allocation2 + $0x4] sm:$0xf]
    %v105 = vld [vmem:[#allocation2 + $0x8] sm:$0xf]
    %v106 = vld [vmem:[#allocation2 + $0xc] sm:$0xf]
    %v107 = vld [vmem:[#allocation2 + $0x10] sm:$0xf]
    %v108 = vld [vmem:[#allocation2 + $0x14] sm:$0xf]
    %v109 = vld [vmem:[#allocation2 + $0x18] sm:$0xf]
    %v110 = vld [vmem:[#allocation2 + $0x1c] sm:$0xf]
    %v111 = vld [vmem:[#allocation2 + $0x20] sm:$0xf]
    %v112 = vld [vmem:[#allocation2 + $0x24] sm:$0xf]
    %v113 = vld [vmem:[#allocation2 + $0x28] sm:$0xf]
    %v114 = vld [vmem:[#allocation2 + $0x2c] sm:$0xf]
    %v115 = vld [vmem:[#allocation2 + $0x30] sm:$0xf]
    %v116 = vld [vmem:[#allocation2 + $0x34] sm:$0xf]
    %v117 = vld [vmem:[#allocation2 + $0x38] sm:$0xf]
    %v118 = vld [vmem:[#allocation2 + $0x3c] sm:$0xf]
    %v135 = vunpack.c.l.b16 %v87
    %v136 = vunpack.c.l.b16 %v88
    %v137 = vunpack.c.l.b16 %v89
    %v138 = vunpack.c.l.b16 %v90
    %v139 = vunpack.c.l.b16 %v91
    %v140 = vunpack.c.l.b16 %v92
    %v141 = vunpack.c.l.b16 %v93
    %v142 = vunpack.c.l.b16 %v94
    %v143 = vunpack.c.l.b16 %v95
    %v144 = vunpack.c.l.b16 %v96
    %v145 = vunpack.c.l.b16 %v97
    %v146 = vunpack.c.l.b16 %v98
    %v147 = vunpack.c.l.b16 %v99
    %v148 = vunpack.c.l.b16 %v100
    %v149 = vunpack.c.l.b16 %v101
    %v150 = vunpack.c.l.b16 %v102
    %v151 = vpack.c.b16 %v136, %v135
    %v152 = vpack.c.b16 %v138, %v137
    %v153 = vpack.c.b16 %v140, %v139
    %v154 = vpack.c.b16 %v142, %v141
    %v155 = vpack.c.b16 %v144, %v143
    %v156 = vpack.c.b16 %v146, %v145
    %v157 = vpack.c.b16 %v148, %v147
    %v158 = vpack.c.b16 %v150, %v149
    %v183 = vunpack.c.l.b16 %v103
    %v184 = vunpack.c.l.b16 %v104
    %v185 = vunpack.c.l.b16 %v105
    %v186 = vunpack.c.l.b16 %v106
    %v187 = vunpack.c.l.b16 %v107
    %v188 = vunpack.c.l.b16 %v108
    %v189 = vunpack.c.l.b16 %v109
    %v190 = vunpack.c.l.b16 %v110
    %v191 = vunpack.c.l.b16 %v111
    %v192 = vunpack.c.l.b16 %v112
    %v193 = vunpack.c.l.b16 %v113
    %v194 = vunpack.c.l.b16 %v114
    %v195 = vunpack.c.l.b16 %v115
    %v196 = vunpack.c.l.b16 %v116
    %v197 = vunpack.c.l.b16 %v117
    %v198 = vunpack.c.l.b16 %v118
    %v199 = vpack.c.b16 %v184, %v183
    %v200 = vpack.c.b16 %v186, %v185
    %v201 = vpack.c.b16 %v188, %v187
    %v202 = vpack.c.b16 %v190, %v189
    %v203 = vpack.c.b16 %v192, %v191
    %v204 = vpack.c.b16 %v194, %v193
    %v205 = vpack.c.b16 %v196, %v195
    %v206 = vpack.c.b16 %v198, %v197
    %215 = vmatprep.subr.bf16.mxu0 0
    %216 = vmatpush1.bf16.msra.mxu0 %v199
    %217 = vmatprep.subr.bf16.mxu0 0
    %218 = vmatpush1.bf16.msra.mxu0 %v200
    %219 = vmatprep.subr.bf16.mxu0 0
    %220 = vmatpush1.bf16.msra.mxu0 %v201
    %221 = vmatprep.subr.bf16.mxu0 0
    %222 = vmatpush1.bf16.msra.mxu0 %v202
    %223 = vmatprep.subr.bf16.mxu0 0
    %224 = vmatpush1.bf16.msra.mxu0 %v203
    %225 = vmatprep.subr.bf16.mxu0 0
    %226 = vmatpush1.bf16.msra.mxu0 %v204
    %227 = vmatprep.subr.bf16.mxu0 0
    %228 = vmatpush1.bf16.msra.mxu0 %v205
    %229 = vmatprep.subr.bf16.mxu0 0
    %230 = vmatpush1.bf16.msra.mxu0 %v206
    %231 = vmatprep.subr.bf16.mxu0 0
    %232 = vmatpush1.bf16.msra.mxu0 0
    %233 = vmatprep.subr.bf16.mxu0 0
    %234 = vmatpush1.bf16.msra.mxu0 0
    %235 = vmatprep.subr.bf16.mxu0 0
    %236 = vmatpush1.bf16.msra.mxu0 0
    %237 = vmatprep.subr.bf16.mxu0 0
    %238 = vmatpush1.bf16.msra.mxu0 0
    %239 = vmatprep.subr.bf16.mxu0 0
    %240 = vmatpush1.bf16.msra.mxu0 0
    %241 = vmatprep.subr.bf16.mxu0 0
    %242 = vmatpush1.bf16.msra.mxu0 0
    %243 = vmatprep.subr.bf16.mxu0 0
    %244 = vmatpush1.bf16.msra.mxu0 0
    %245 = vmatprep.subr.bf16.mxu0 0
    %246 = vmatpush1.bf16.msra.mxu0 0
    %247 = vmatprep.mubr.bf16.mxu0 0
    %248 = vmatmul.mubr.bf16.gmra.mrb[0].mxu0 %v151
    %v249 = vpop.f32.mrb[0].mxu0
    %v250 = vadd.f32 0.0, %v249
    %v251 = vpop.f32.mrb[0].mxu0
    %v252 = vpop.f32.mrb[0].mxu0
    %v253 = vadd.f32 0.0, %v252
    %v254 = vpop.f32.mrb[0].mxu0
    %255 = vmatprep.mubr.bf16.mxu0 0
    %256 = vmatmul.mubr.bf16.gmra.mrb[0].mxu0 %v152
    %v257 = vpop.f32.mrb[0].mxu0
    %v258 = vadd.f32 0.0, %v257
    %v259 = vpop.f32.mrb[0].mxu0
    %v260 = vpop.f32.mrb[0].mxu0
    %v261 = vadd.f32 0.0, %v260
    %v262 = vpop.f32.mrb[0].mxu0
    %263 = vmatprep.mubr.bf16.mxu0 0
    %264 = vmatmul.mubr.bf16.gmra.mrb[0].mxu0 %v153
    %v265 = vpop.f32.mrb[0].mxu0
    %v266 = vadd.f32 0.0, %v265
    %v267 = vpop.f32.mrb[0].mxu0
    %v268 = vpop.f32.mrb[0].mxu0
    %v269 = vadd.f32 0.0, %v268
    %v270 = vpop.f32.mrb[0].mxu0
    %271 = vmatprep.mubr.bf16.mxu0 0
    %272 = vmatmul.mubr.bf16.gmra.mrb[0].mxu0 %v154
    %v273 = vpop.f32.mrb[0].mxu0
    %v274 = vadd.f32 0.0, %v273
    %v275 = vpop.f32.mrb[0].mxu0
    %v276 = vpop.f32.mrb[0].mxu0
    %v277 = vadd.f32 0.0, %v276
    %v278 = vpop.f32.mrb[0].mxu0
    %279 = vmatprep.mubr.bf16.mxu0 0
    %280 = vmatmul.mubr.bf16.gmra.mrb[0].mxu0 %v155
    %v281 = vpop.f32.mrb[0].mxu0
    %v282 = vadd.f32 0.0, %v281
    %v283 = vpop.f32.mrb[0].mxu0
    %v284 = vpop.f32.mrb[0].mxu0
    %v285 = vadd.f32 0.0, %v284
    %v286 = vpop.f32.mrb[0].mxu0
    %287 = vmatprep.mubr.bf16.mxu0 0
    %288 = vmatmul.mubr.bf16.gmra.mrb[0].mxu0 %v156
    %v289 = vpop.f32.mrb[0].mxu0
    %v290 = vadd.f32 0.0, %v289
    %v291 = vpop.f32.mrb[0].mxu0
    %v292 = vpop.f32.mrb[0].mxu0
    %v293 = vadd.f32 0.0, %v292
    %v294 = vpop.f32.mrb[0].mxu0
    %295 = vmatprep.mubr.bf16.mxu0 0
    %296 = vmatmul.mubr.bf16.gmra.mrb[0].mxu0 %v157
    %v297 = vpop.f32.mrb[0].mxu0
    %v298 = vadd.f32 0.0, %v297
    %v299 = vpop.f32.mrb[0].mxu0
    %v300 = vpop.f32.mrb[0].mxu0
    %v301 = vadd.f32 0.0, %v300
    %v302 = vpop.f32.mrb[0].mxu0
    %303 = vmatprep.mubr.bf16.mxu0 0
    %304 = vmatmul.mubr.bf16.gmra.mrb[0].mxu0 %v158
    %v305 = vpop.f32.mrb[0].mxu0
    %v306 = vadd.f32 0.0, %v305
    %v307 = vpop.f32.mrb[0].mxu0
    %v308 = vpop.f32.mrb[0].mxu0
    %v309 = vadd.f32 0.0, %v308
    %v310 = vpop.f32.mrb[0].mxu0
    %311 = vdwg.mxu0
    %v312 = vpack.c.bf16 %v253, %v250
    %v313 = vpack.c.bf16 %v261, %v258
    %v314 = vpack.c.bf16 %v269, %v266
    %v315 = vpack.c.bf16 %v277, %v274
    %v316 = vpack.c.bf16 %v285, %v282
    %v317 = vpack.c.bf16 %v293, %v290
    %v318 = vpack.c.bf16 %v301, %v298
    %v319 = vpack.c.bf16 %v309, %v306
    %v320 = vld [vmem:[%s3] sm:$0x1]
    %v322 = vlaneseq
    %v323 = vshrl.u32 %v322, 7
    %v324 = vsub.s32 0, %v323
    %v325 = vrot.slane %v320, %v324
    %v343 = vunpack.c.l.b16 %v71
    %v344 = vunpack.c.l.b16 %v72
    %v345 = vunpack.c.l.b16 %v73
    %v346 = vunpack.c.l.b16 %v74
    %v347 = vunpack.c.l.b16 %v75
    %v348 = vunpack.c.l.b16 %v76
    %v349 = vunpack.c.l.b16 %v77
    %v350 = vunpack.c.l.b16 %v78
    %v351 = vunpack.c.l.b16 %v79
    %v352 = vunpack.c.l.b16 %v80
    %v353 = vunpack.c.l.b16 %v81
    %v354 = vunpack.c.l.b16 %v82
    %v355 = vunpack.c.l.b16 %v83
    %v356 = vunpack.c.l.b16 %v84
    %v357 = vunpack.c.l.b16 %v85
    %v358 = vunpack.c.l.b16 %v86
    %v359 = vpack.c.b16 %v344, %v343
    %v360 = vpack.c.b16 %v346, %v345
    %v361 = vpack.c.b16 %v348, %v347
    %v362 = vpack.c.b16 %v350, %v349
    %v363 = vpack.c.b16 %v352, %v351
    %v364 = vpack.c.b16 %v354, %v353
    %v365 = vpack.c.b16 %v356, %v355
    %v366 = vpack.c.b16 %v358, %v357
    %375 = vmatprep.subr.bf16.mxu0 0
    %376 = vmatpush1.bf16.msra.mxu0 %v312
    %377 = vmatprep.subr.bf16.mxu0 0
    %378 = vmatpush1.bf16.msra.mxu0 %v313
    %379 = vmatprep.subr.bf16.mxu0 0
    %380 = vmatpush1.bf16.msra.mxu0 %v314
    %381 = vmatprep.subr.bf16.mxu0 0
    %382 = vmatpush1.bf16.msra.mxu0 %v315
    %383 = vmatprep.subr.bf16.mxu0 0
    %384 = vmatpush1.bf16.msra.mxu0 %v316
    %385 = vmatprep.subr.bf16.mxu0 0
    %386 = vmatpush1.bf16.msra.mxu0 %v317
    %387 = vmatprep.subr.bf16.mxu0 0
    %388 = vmatpush1.bf16.msra.mxu0 %v318
    %389 = vmatprep.subr.bf16.mxu0 0
    %390 = vmatpush1.bf16.msra.mxu0 %v319
    %391 = vmatprep.subr.bf16.mxu0 0
    %392 = vmatpush1.bf16.msra.mxu0 0
    %393 = vmatprep.subr.bf16.mxu0 0
    %394 = vmatpush1.bf16.msra.mxu0 0
    %395 = vmatprep.subr.bf16.mxu0 0
    %396 = vmatpush1.bf16.msra.mxu0 0
    %397 = vmatprep.subr.bf16.mxu0 0
    %398 = vmatpush1.bf16.msra.mxu0 0
    %399 = vmatprep.subr.bf16.mxu0 0
    %400 = vmatpush1.bf16.msra.mxu0 0
    %401 = vmatprep.subr.bf16.mxu0 0
    %402 = vmatpush1.bf16.msra.mxu0 0
    %403 = vmatprep.subr.bf16.mxu0 0
    %404 = vmatpush1.bf16.msra.mxu0 0
    %405 = vmatprep.subr.bf16.mxu0 0
    %406 = vmatpush1.bf16.msra.mxu0 0
    %407 = vmatprep.mubr.bf16.mxu0 0
    %408 = vmatmul.mubr.bf16.gmra.mrb[0].mxu0 %v359
    %v409 = vpop.f32.mrb[0].mxu0
    %v410 = vadd.f32 %v325, %v409
    %v411 = vpop.f32.mrb[0].mxu0
    %v412 = vpop.f32.mrb[0].mxu0
    %v413 = vadd.f32 %v325, %v412
    %v414 = vpop.f32.mrb[0].mxu0
    %415 = vmatprep.mubr.bf16.mxu0 0
    %416 = vmatmul.mubr.bf16.gmra.mrb[0].mxu0 %v360
    %v417 = vpop.f32.mrb[0].mxu0
    %v418 = vadd.f32 %v325, %v417
    %v419 = vpop.f32.mrb[0].mxu0
    %v420 = vpop.f32.mrb[0].mxu0
    %v421 = vadd.f32 %v325, %v420
    %v422 = vpop.f32.mrb[0].mxu0
    %423 = vmatprep.mubr.bf16.mxu0 0
    %424 = vmatmul.mubr.bf16.gmra.mrb[0].mxu0 %v361
    %v425 = vpop.f32.mrb[0].mxu0
    %v426 = vadd.f32 %v325, %v425
    %v427 = vpop.f32.mrb[0].mxu0
    %v428 = vpop.f32.mrb[0].mxu0
    %v429 = vadd.f32 %v325, %v428
    %v430 = vpop.f32.mrb[0].mxu0
    %431 = vmatprep.mubr.bf16.mxu0 0
    %432 = vmatmul.mubr.bf16.gmra.mrb[0].mxu0 %v362
    %v433 = vpop.f32.mrb[0].mxu0
    %v434 = vadd.f32 %v325, %v433
    %v435 = vpop.f32.mrb[0].mxu0
    %v436 = vpop.f32.mrb[0].mxu0
    %v437 = vadd.f32 %v325, %v436
    %v438 = vpop.f32.mrb[0].mxu0
    %439 = vmatprep.mubr.bf16.mxu0 0
    %440 = vmatmul.mubr.bf16.gmra.mrb[0].mxu0 %v363
    %v441 = vpop.f32.mrb[0].mxu0
    %v442 = vadd.f32 %v325, %v441
    %v443 = vpop.f32.mrb[0].mxu0
    %v444 = vpop.f32.mrb[0].mxu0
    %v445 = vadd.f32 %v325, %v444
    %v446 = vpop.f32.mrb[0].mxu0
    %447 = vmatprep.mubr.bf16.mxu0 0
    %448 = vmatmul.mubr.bf16.gmra.mrb[0].mxu0 %v364
    %v449 = vpop.f32.mrb[0].mxu0
    %v450 = vadd.f32 %v325, %v449
    %v451 = vpop.f32.mrb[0].mxu0
    %v452 = vpop.f32.mrb[0].mxu0
    %v453 = vadd.f32 %v325, %v452
    %v454 = vpop.f32.mrb[0].mxu0
    %455 = vmatprep.mubr.bf16.mxu0 0
    %456 = vmatmul.mubr.bf16.gmra.mrb[0].mxu0 %v365
    %v457 = vpop.f32.mrb[0].mxu0
    %v458 = vadd.f32 %v325, %v457
    %v459 = vpop.f32.mrb[0].mxu0
    %v460 = vpop.f32.mrb[0].mxu0
    %v461 = vadd.f32 %v325, %v460
    %v462 = vpop.f32.mrb[0].mxu0
    %463 = vmatprep.mubr.bf16.mxu0 0
    %464 = vmatmul.mubr.bf16.gmra.mrb[0].mxu0 %v366
    %v465 = vpop.f32.mrb[0].mxu0
    %v466 = vadd.f32 %v325, %v465
    %v467 = vpop.f32.mrb[0].mxu0
    %v468 = vpop.f32.mrb[0].mxu0
    %v469 = vadd.f32 %v325, %v468
    %v470 = vpop.f32.mrb[0].mxu0
    %471 = vdwg.mxu0
    %v472 = vmax.f32 %v410, 0.0
    %v473 = vmax.f32 %v413, 0.0
    %v474 = vmax.f32 %v418, 0.0
    %v475 = vmax.f32 %v421, 0.0
    %v476 = vmax.f32 %v426, 0.0
    %v477 = vmax.f32 %v429, 0.0
    %v478 = vmax.f32 %v434, 0.0
    %v479 = vmax.f32 %v437, 0.0
    %v480 = vmax.f32 %v442, 0.0
    %v481 = vmax.f32 %v445, 0.0
    %v482 = vmax.f32 %v450, 0.0
    %v483 = vmax.f32 %v453, 0.0
    %v484 = vmax.f32 %v458, 0.0
    %v485 = vmax.f32 %v461, 0.0
    %v486 = vmax.f32 %v466, 0.0
    %v487 = vmax.f32 %v469, 0.0
    %v488 = vpack.c.bf16 %v473, %v472
    %v489 = vpack.c.bf16 %v475, %v474
    %v490 = vpack.c.bf16 %v477, %v476
    %v491 = vpack.c.bf16 %v479, %v478
    %v492 = vpack.c.bf16 %v481, %v480
    %v493 = vpack.c.bf16 %v483, %v482
    %v494 = vpack.c.bf16 %v485, %v484
    %v495 = vpack.c.bf16 %v487, %v486
    %v496 = vld [vmem:[#allocation4] sm:$0xf]
    %v497 = vld [vmem:[#allocation4 + $0x4] sm:$0xf]
    %v498 = vld [vmem:[#allocation4 + $0x8] sm:$0xf]
    %v499 = vld [vmem:[#allocation4 + $0xc] sm:$0xf]
    %v500 = vld [vmem:[#allocation4 + $0x10] sm:$0xf]
    %v501 = vld [vmem:[#allocation4 + $0x14] sm:$0xf]
    %v502 = vld [vmem:[#allocation4 + $0x18] sm:$0xf]
    %v503 = vld [vmem:[#allocation4 + $0x1c] sm:$0xf]
    %v504 = vld [vmem:[#allocation4 + $0x20] sm:$0xf]
    %v505 = vld [vmem:[#allocation4 + $0x24] sm:$0xf]
    %v506 = vld [vmem:[#allocation4 + $0x28] sm:$0xf]
    %v507 = vld [vmem:[#allocation4 + $0x2c] sm:$0xf]
    %v508 = vld [vmem:[#allocation4 + $0x30] sm:$0xf]
    %v509 = vld [vmem:[#allocation4 + $0x34] sm:$0xf]
    %v510 = vld [vmem:[#allocation4 + $0x38] sm:$0xf]
    %v511 = vld [vmem:[#allocation4 + $0x3c] sm:$0xf]
    %v528 = vunpack.c.l.b16 %v496
    %v529 = vunpack.c.l.b16 %v497
    %v530 = vunpack.c.l.b16 %v498
    %v531 = vunpack.c.l.b16 %v499
    %v532 = vunpack.c.l.b16 %v500
    %v533 = vunpack.c.l.b16 %v501
    %v534 = vunpack.c.l.b16 %v502
    %v535 = vunpack.c.l.b16 %v503
    %v536 = vunpack.c.l.b16 %v504
    %v537 = vunpack.c.l.b16 %v505
    %v538 = vunpack.c.l.b16 %v506
    %v539 = vunpack.c.l.b16 %v507
    %v540 = vunpack.c.l.b16 %v508
    %v541 = vunpack.c.l.b16 %v509
    %v542 = vunpack.c.l.b16 %v510
    %v543 = vunpack.c.l.b16 %v511
    %v544 = vpack.c.b16 %v529, %v528
    %v545 = vpack.c.b16 %v531, %v530
    %v546 = vpack.c.b16 %v533, %v532
    %v547 = vpack.c.b16 %v535, %v534
    %v548 = vpack.c.b16 %v537, %v536
    %v549 = vpack.c.b16 %v539, %v538
    %v550 = vpack.c.b16 %v541, %v540
    %v551 = vpack.c.b16 %v543, %v542
    %560 = vmatprep.subr.bf16.mxu0 0
    %561 = vmatpush1.bf16.msra.mxu0 %v544
    %562 = vmatprep.subr.bf16.mxu0 0
    %563 = vmatpush1.bf16.msra.mxu0 %v545
    %564 = vmatprep.subr.bf16.mxu0 0
    %565 = vmatpush1.bf16.msra.mxu0 %v546
    %566 = vmatprep.subr.bf16.mxu0 0
    %567 = vmatpush1.bf16.msra.mxu0 %v547
    %568 = vmatprep.subr.bf16.mxu0 0
    %569 = vmatpush1.bf16.msra.mxu0 %v548
    %570 = vmatprep.subr.bf16.mxu0 0
    %571 = vmatpush1.bf16.msra.mxu0 %v549
    %572 = vmatprep.subr.bf16.mxu0 0
    %573 = vmatpush1.bf16.msra.mxu0 %v550
    %574 = vmatprep.subr.bf16.mxu0 0
    %575 = vmatpush1.bf16.msra.mxu0 %v551
    %576 = vmatprep.subr.bf16.mxu0 0
    %577 = vmatpush1.bf16.msra.mxu0 0
    %578 = vmatprep.subr.bf16.mxu0 0
    %579 = vmatpush1.bf16.msra.mxu0 0
    %580 = vmatprep.subr.bf16.mxu0 0
    %581 = vmatpush1.bf16.msra.mxu0 0
    %582 = vmatprep.subr.bf16.mxu0 0
    %583 = vmatpush1.bf16.msra.mxu0 0
    %584 = vmatprep.subr.bf16.mxu0 0
    %585 = vmatpush1.bf16.msra.mxu0 0
    %586 = vmatprep.subr.bf16.mxu0 0
    %587 = vmatpush1.bf16.msra.mxu0 0
    %588 = vmatprep.subr.bf16.mxu0 0
    %589 = vmatpush1.bf16.msra.mxu0 0
    %590 = vmatprep.subr.bf16.mxu0 0
    %591 = vmatpush1.bf16.msra.mxu0 0
    %592 = vmatprep.mubr.bf16.mxu0 0
    %593 = vmatmul.mubr.bf16.gmra.mrb[0].mxu0 %v488
    %v594 = vpop.f32.mrb[0].mxu0
    %v595 = vadd.f32 0.0, %v594
    %v596 = vpop.f32.mrb[0].mxu0
    %v597 = vpop.f32.mrb[0].mxu0
    %v598 = vadd.f32 0.0, %v597
    %v599 = vpop.f32.mrb[0].mxu0
    %600 = vmatprep.mubr.bf16.mxu0 0
    %601 = vmatmul.mubr.bf16.gmra.mrb[0].mxu0 %v489
    %v602 = vpop.f32.mrb[0].mxu0
    %v603 = vadd.f32 0.0, %v602
    %v604 = vpop.f32.mrb[0].mxu0
    %v605 = vpop.f32.mrb[0].mxu0
    %v606 = vadd.f32 0.0, %v605
    %v607 = vpop.f32.mrb[0].mxu0
    %608 = vmatprep.mubr.bf16.mxu0 0
    %609 = vmatmul.mubr.bf16.gmra.mrb[0].mxu0 %v490
    %v610 = vpop.f32.mrb[0].mxu0
    %v611 = vadd.f32 0.0, %v610
    %v612 = vpop.f32.mrb[0].mxu0
    %v613 = vpop.f32.mrb[0].mxu0
    %v614 = vadd.f32 0.0, %v613
    %v615 = vpop.f32.mrb[0].mxu0
    %616 = vmatprep.mubr.bf16.mxu0 0
    %617 = vmatmul.mubr.bf16.gmra.mrb[0].mxu0 %v491
    %v618 = vpop.f32.mrb[0].mxu0
    %v619 = vadd.f32 0.0, %v618
    %v620 = vpop.f32.mrb[0].mxu0
    %v621 = vpop.f32.mrb[0].mxu0
    %v622 = vadd.f32 0.0, %v621
    %v623 = vpop.f32.mrb[0].mxu0
    %624 = vmatprep.mubr.bf16.mxu0 0
    %625 = vmatmul.mubr.bf16.gmra.mrb[0].mxu0 %v492
    %v626 = vpop.f32.mrb[0].mxu0
    %v627 = vadd.f32 0.0, %v626
    %v628 = vpop.f32.mrb[0].mxu0
    %v629 = vpop.f32.mrb[0].mxu0
    %v630 = vadd.f32 0.0, %v629
    %v631 = vpop.f32.mrb[0].mxu0
    %632 = vmatprep.mubr.bf16.mxu0 0
    %633 = vmatmul.mubr.bf16.gmra.mrb[0].mxu0 %v493
    %v634 = vpop.f32.mrb[0].mxu0
    %v635 = vadd.f32 0.0, %v634
    %v636 = vpop.f32.mrb[0].mxu0
    %v637 = vpop.f32.mrb[0].mxu0
    %v638 = vadd.f32 0.0, %v637
    %v639 = vpop.f32.mrb[0].mxu0
    %640 = vmatprep.mubr.bf16.mxu0 0
    %641 = vmatmul.mubr.bf16.gmra.mrb[0].mxu0 %v494
    %v642 = vpop.f32.mrb[0].mxu0
    %v643 = vadd.f32 0.0, %v642
    %v644 = vpop.f32.mrb[0].mxu0
    %v645 = vpop.f32.mrb[0].mxu0
    %v646 = vadd.f32 0.0, %v645
    %v647 = vpop.f32.mrb[0].mxu0
    %648 = vmatprep.mubr.bf16.mxu0 0
    %649 = vmatmul.mubr.bf16.gmra.mrb[0].mxu0 %v495
    %v650 = vpop.f32.mrb[0].mxu0
    %v651 = vadd.f32 0.0, %v650
    %v652 = vpop.f32.mrb[0].mxu0
    %v653 = vpop.f32.mrb[0].mxu0
    %v654 = vadd.f32 0.0, %v653
    %v655 = vpop.f32.mrb[0].mxu0
    %656 = vdwg.mxu0
    %v657 = vpack.c.bf16 %v598, %v595
    %v658 = vpack.c.bf16 %v606, %v603
    %v659 = vpack.c.bf16 %v614, %v611
    %v660 = vpack.c.bf16 %v622, %v619
    %v661 = vpack.c.bf16 %v630, %v627
    %v662 = vpack.c.bf16 %v638, %v635
    %v663 = vpack.c.bf16 %v646, %v643
    %v664 = vpack.c.bf16 %v654, %v651
    %v665 = vld [vmem:[%s5] sm:$0x1]
    %v667 = vlaneseq
    %v668 = vshrl.u32 %v667, 7
    %v669 = vsub.s32 0, %v668
    %v670 = vrot.slane %v665, %v669
    %672 = vmatprep.subr.bf16.mxu0 0
    %673 = vmatpush1.bf16.msra.mxu0 %v657
    %674 = vmatprep.subr.bf16.mxu0 0
    %675 = vmatpush1.bf16.msra.mxu0 %v658
    %676 = vmatprep.subr.bf16.mxu0 0
    %677 = vmatpush1.bf16.msra.mxu0 %v659
    %678 = vmatprep.subr.bf16.mxu0 0
    %679 = vmatpush1.bf16.msra.mxu0 %v660
    %680 = vmatprep.subr.bf16.mxu0 0
    %681 = vmatpush1.bf16.msra.mxu0 %v661
    %682 = vmatprep.subr.bf16.mxu0 0
    %683 = vmatpush1.bf16.msra.mxu0 %v662
    %684 = vmatprep.subr.bf16.mxu0 0
    %685 = vmatpush1.bf16.msra.mxu0 %v663
    %686 = vmatprep.subr.bf16.mxu0 0
    %687 = vmatpush1.bf16.msra.mxu0 %v664
    %688 = vmatprep.subr.bf16.mxu0 0
    %689 = vmatpush1.bf16.msra.mxu0 0
    %690 = vmatprep.subr.bf16.mxu0 0
    %691 = vmatpush1.bf16.msra.mxu0 0
    %692 = vmatprep.subr.bf16.mxu0 0
    %693 = vmatpush1.bf16.msra.mxu0 0
    %694 = vmatprep.subr.bf16.mxu0 0
    %695 = vmatpush1.bf16.msra.mxu0 0
    %696 = vmatprep.subr.bf16.mxu0 0
    %697 = vmatpush1.bf16.msra.mxu0 0
    %698 = vmatprep.subr.bf16.mxu0 0
    %699 = vmatpush1.bf16.msra.mxu0 0
    %700 = vmatprep.subr.bf16.mxu0 0
    %701 = vmatpush1.bf16.msra.mxu0 0
    %702 = vmatprep.subr.bf16.mxu0 0
    %703 = vmatpush1.bf16.msra.mxu0 0
    %704 = vmatprep.mubr.bf16.mxu0 0
    %705 = vmatmul.mubr.bf16.gmra.mrb[0].mxu0 %v359
    %v706 = vpop.f32.mrb[0].mxu0
    %v707 = vadd.f32 %v670, %v706
    %v708 = vpop.f32.mrb[0].mxu0
    %v709 = vpop.f32.mrb[0].mxu0
    %v710 = vadd.f32 %v670, %v709
    %v711 = vpop.f32.mrb[0].mxu0
    %712 = vmatprep.mubr.bf16.mxu0 0
    %713 = vmatmul.mubr.bf16.gmra.mrb[0].mxu0 %v360
    %v714 = vpop.f32.mrb[0].mxu0
    %v715 = vadd.f32 %v670, %v714
    %v716 = vpop.f32.mrb[0].mxu0
    %v717 = vpop.f32.mrb[0].mxu0
    %v718 = vadd.f32 %v670, %v717
    %v719 = vpop.f32.mrb[0].mxu0
    %720 = vmatprep.mubr.bf16.mxu0 0
    %721 = vmatmul.mubr.bf16.gmra.mrb[0].mxu0 %v361
    %v722 = vpop.f32.mrb[0].mxu0
    %v723 = vadd.f32 %v670, %v722
    %v724 = vpop.f32.mrb[0].mxu0
    %v725 = vpop.f32.mrb[0].mxu0
    %v726 = vadd.f32 %v670, %v725
    %v727 = vpop.f32.mrb[0].mxu0
    %728 = vmatprep.mubr.bf16.mxu0 0
    %729 = vmatmul.mubr.bf16.gmra.mrb[0].mxu0 %v362
    %v730 = vpop.f32.mrb[0].mxu0
    %v731 = vadd.f32 %v670, %v730
    %v732 = vpop.f32.mrb[0].mxu0
    %v733 = vpop.f32.mrb[0].mxu0
    %v734 = vadd.f32 %v670, %v733
    %v735 = vpop.f32.mrb[0].mxu0
    %736 = vmatprep.mubr.bf16.mxu0 0
    %737 = vmatmul.mubr.bf16.gmra.mrb[0].mxu0 %v363
    %v738 = vpop.f32.mrb[0].mxu0
    %v739 = vadd.f32 %v670, %v738
    %v740 = vpop.f32.mrb[0].mxu0
    %v741 = vpop.f32.mrb[0].mxu0
    %v742 = vadd.f32 %v670, %v741
    %v743 = vpop.f32.mrb[0].mxu0
    %744 = vmatprep.mubr.bf16.mxu0 0
    %745 = vmatmul.mubr.bf16.gmra.mrb[0].mxu0 %v364
    %v746 = vpop.f32.mrb[0].mxu0
    %v747 = vadd.f32 %v670, %v746
    %v748 = vpop.f32.mrb[0].mxu0
    %v749 = vpop.f32.mrb[0].mxu0
    %v750 = vadd.f32 %v670, %v749
    %v751 = vpop.f32.mrb[0].mxu0
    %752 = vmatprep.mubr.bf16.mxu0 0
    %753 = vmatmul.mubr.bf16.gmra.mrb[0].mxu0 %v365
    %v754 = vpop.f32.mrb[0].mxu0
    %v755 = vadd.f32 %v670, %v754
    %v756 = vpop.f32.mrb[0].mxu0
    %v757 = vpop.f32.mrb[0].mxu0
    %v758 = vadd.f32 %v670, %v757
    %v759 = vpop.f32.mrb[0].mxu0
    %760 = vmatprep.mubr.bf16.mxu0 0
    %761 = vmatmul.mubr.bf16.gmra.mrb[0].mxu0 %v366
    %v762 = vpop.f32.mrb[0].mxu0
    %v763 = vadd.f32 %v670, %v762
    %v764 = vpop.f32.mrb[0].mxu0
    %v765 = vpop.f32.mrb[0].mxu0
    %v766 = vadd.f32 %v670, %v765
    %v767 = vpop.f32.mrb[0].mxu0
    %768 = vdwg.mxu0
    %v769 = vmax.f32 %v707, 0.0
    %v770 = vmax.f32 %v710, 0.0
    %v771 = vmax.f32 %v715, 0.0
    %v772 = vmax.f32 %v718, 0.0
    %v773 = vmax.f32 %v723, 0.0
    %v774 = vmax.f32 %v726, 0.0
    %v775 = vmax.f32 %v731, 0.0
    %v776 = vmax.f32 %v734, 0.0
    %v777 = vmax.f32 %v739, 0.0
    %v778 = vmax.f32 %v742, 0.0
    %v779 = vmax.f32 %v747, 0.0
    %v780 = vmax.f32 %v750, 0.0
    %v781 = vmax.f32 %v755, 0.0
    %v782 = vmax.f32 %v758, 0.0
    %v783 = vmax.f32 %v763, 0.0
    %v784 = vmax.f32 %v766, 0.0
    %v785 = vpack.c.bf16 %v770, %v769
    %v786 = vpack.c.bf16 %v772, %v771
    %v787 = vpack.c.bf16 %v774, %v773
    %v788 = vpack.c.bf16 %v776, %v775
    %v789 = vpack.c.bf16 %v778, %v777
    %v790 = vpack.c.bf16 %v780, %v779
    %v791 = vpack.c.bf16 %v782, %v781
    %v792 = vpack.c.bf16 %v784, %v783
    %v793 = vld [vmem:[#allocation6] sm:$0xf]
    %v794 = vld [vmem:[#allocation6 + $0x4] sm:$0xf]
    %v795 = vld [vmem:[#allocation6 + $0x8] sm:$0xf]
    %v796 = vld [vmem:[#allocation6 + $0xc] sm:$0xf]
    %v797 = vld [vmem:[#allocation6 + $0x10] sm:$0xf]
    %v798 = vld [vmem:[#allocation6 + $0x14] sm:$0xf]
    %v799 = vld [vmem:[#allocation6 + $0x18] sm:$0xf]
    %v800 = vld [vmem:[#allocation6 + $0x1c] sm:$0xf]
    %v801 = vld [vmem:[#allocation6 + $0x20] sm:$0xf]
    %v802 = vld [vmem:[#allocation6 + $0x24] sm:$0xf]
    %v803 = vld [vmem:[#allocation6 + $0x28] sm:$0xf]
    %v804 = vld [vmem:[#allocation6 + $0x2c] sm:$0xf]
    %v805 = vld [vmem:[#allocation6 + $0x30] sm:$0xf]
    %v806 = vld [vmem:[#allocation6 + $0x34] sm:$0xf]
    %v807 = vld [vmem:[#allocation6 + $0x38] sm:$0xf]
    %v808 = vld [vmem:[#allocation6 + $0x3c] sm:$0xf]
    %v825 = vunpack.c.l.b16 %v793
    %v826 = vunpack.c.l.b16 %v794
    %v827 = vunpack.c.l.b16 %v795
    %v828 = vunpack.c.l.b16 %v796
    %v829 = vunpack.c.l.b16 %v797
    %v830 = vunpack.c.l.b16 %v798
    %v831 = vunpack.c.l.b16 %v799
    %v832 = vunpack.c.l.b16 %v800
    %v833 = vunpack.c.l.b16 %v801
    %v834 = vunpack.c.l.b16 %v802
    %v835 = vunpack.c.l.b16 %v803
    %v836 = vunpack.c.l.b16 %v804
    %v837 = vunpack.c.l.b16 %v805
    %v838 = vunpack.c.l.b16 %v806
    %v839 = vunpack.c.l.b16 %v807
    %v840 = vunpack.c.l.b16 %v808
    %v841 = vpack.c.b16 %v826, %v825
    %v842 = vpack.c.b16 %v828, %v827
    %v843 = vpack.c.b16 %v830, %v829
    %v844 = vpack.c.b16 %v832, %v831
    %v845 = vpack.c.b16 %v834, %v833
    %v846 = vpack.c.b16 %v836, %v835
    %v847 = vpack.c.b16 %v838, %v837
    %v848 = vpack.c.b16 %v840, %v839
    %857 = vmatprep.subr.bf16.mxu0 0
    %858 = vmatpush1.bf16.msra.mxu0 %v841
    %859 = vmatprep.subr.bf16.mxu0 0
    %860 = vmatpush1.bf16.msra.mxu0 %v842
    %861 = vmatprep.subr.bf16.mxu0 0
    %862 = vmatpush1.bf16.msra.mxu0 %v843
    %863 = vmatprep.subr.bf16.mxu0 0
    %864 = vmatpush1.bf16.msra.mxu0 %v844
    %865 = vmatprep.subr.bf16.mxu0 0
    %866 = vmatpush1.bf16.msra.mxu0 %v845
    %867 = vmatprep.subr.bf16.mxu0 0
    %868 = vmatpush1.bf16.msra.mxu0 %v846
    %869 = vmatprep.subr.bf16.mxu0 0
    %870 = vmatpush1.bf16.msra.mxu0 %v847
    %871 = vmatprep.subr.bf16.mxu0 0
    %872 = vmatpush1.bf16.msra.mxu0 %v848
    %873 = vmatprep.subr.bf16.mxu0 0
    %874 = vmatpush1.bf16.msra.mxu0 0
    %875 = vmatprep.subr.bf16.mxu0 0
    %876 = vmatpush1.bf16.msra.mxu0 0
    %877 = vmatprep.subr.bf16.mxu0 0
    %878 = vmatpush1.bf16.msra.mxu0 0
    %879 = vmatprep.subr.bf16.mxu0 0
    %880 = vmatpush1.bf16.msra.mxu0 0
    %881 = vmatprep.subr.bf16.mxu0 0
    %882 = vmatpush1.bf16.msra.mxu0 0
    %883 = vmatprep.subr.bf16.mxu0 0
    %884 = vmatpush1.bf16.msra.mxu0 0
    %885 = vmatprep.subr.bf16.mxu0 0
    %886 = vmatpush1.bf16.msra.mxu0 0
    %887 = vmatprep.subr.bf16.mxu0 0
    %888 = vmatpush1.bf16.msra.mxu0 0
    %889 = vmatprep.mubr.bf16.mxu0 0
    %890 = vmatmul.mubr.bf16.gmra.mrb[0].mxu0 %v785
    %v891 = vpop.f32.mrb[0].mxu0
    %v892 = vadd.f32 0.0, %v891
    %v893 = vpop.f32.mrb[0].mxu0
    %v894 = vpop.f32.mrb[0].mxu0
    %v895 = vadd.f32 0.0, %v894
    %v896 = vpop.f32.mrb[0].mxu0
    %897 = vmatprep.mubr.bf16.mxu0 0
    %898 = vmatmul.mubr.bf16.gmra.mrb[0].mxu0 %v786
    %v899 = vpop.f32.mrb[0].mxu0
    %v900 = vadd.f32 0.0, %v899
    %v901 = vpop.f32.mrb[0].mxu0
    %v902 = vpop.f32.mrb[0].mxu0
    %v903 = vadd.f32 0.0, %v902
    %v904 = vpop.f32.mrb[0].mxu0
    %905 = vmatprep.mubr.bf16.mxu0 0
    %906 = vmatmul.mubr.bf16.gmra.mrb[0].mxu0 %v787
    %v907 = vpop.f32.mrb[0].mxu0
    %v908 = vadd.f32 0.0, %v907
    %v909 = vpop.f32.mrb[0].mxu0
    %v910 = vpop.f32.mrb[0].mxu0
    %v911 = vadd.f32 0.0, %v910
    %v912 = vpop.f32.mrb[0].mxu0
    %913 = vmatprep.mubr.bf16.mxu0 0
    %914 = vmatmul.mubr.bf16.gmra.mrb[0].mxu0 %v788
    %v915 = vpop.f32.mrb[0].mxu0
    %v916 = vadd.f32 0.0, %v915
    %v917 = vpop.f32.mrb[0].mxu0
    %v918 = vpop.f32.mrb[0].mxu0
    %v919 = vadd.f32 0.0, %v918
    %v920 = vpop.f32.mrb[0].mxu0
    %921 = vmatprep.mubr.bf16.mxu0 0
    %922 = vmatmul.mubr.bf16.gmra.mrb[0].mxu0 %v789
    %v923 = vpop.f32.mrb[0].mxu0
    %v924 = vadd.f32 0.0, %v923
    %v925 = vpop.f32.mrb[0].mxu0
    %v926 = vpop.f32.mrb[0].mxu0
    %v927 = vadd.f32 0.0, %v926
    %v928 = vpop.f32.mrb[0].mxu0
    %929 = vmatprep.mubr.bf16.mxu0 0
    %930 = vmatmul.mubr.bf16.gmra.mrb[0].mxu0 %v790
    %v931 = vpop.f32.mrb[0].mxu0
    %v932 = vadd.f32 0.0, %v931
    %v933 = vpop.f32.mrb[0].mxu0
    %v934 = vpop.f32.mrb[0].mxu0
    %v935 = vadd.f32 0.0, %v934
    %v936 = vpop.f32.mrb[0].mxu0
    %937 = vmatprep.mubr.bf16.mxu0 0
    %938 = vmatmul.mubr.bf16.gmra.mrb[0].mxu0 %v791
    %v939 = vpop.f32.mrb[0].mxu0
    %v940 = vadd.f32 0.0, %v939
    %v941 = vpop.f32.mrb[0].mxu0
    %v942 = vpop.f32.mrb[0].mxu0
    %v943 = vadd.f32 0.0, %v942
    %v944 = vpop.f32.mrb[0].mxu0
    %945 = vmatprep.mubr.bf16.mxu0 0
    %946 = vmatmul.mubr.bf16.gmra.mrb[0].mxu0 %v792
    %v947 = vpop.f32.mrb[0].mxu0
    %v948 = vadd.f32 0.0, %v947
    %v949 = vpop.f32.mrb[0].mxu0
    %v950 = vpop.f32.mrb[0].mxu0
    %v951 = vadd.f32 0.0, %v950
    %v952 = vpop.f32.mrb[0].mxu0
    %953 = vdwg.mxu0
    %v954 = vpack.c.bf16 %v895, %v892
    %v955 = vpack.c.bf16 %v903, %v900
    %v956 = vpack.c.bf16 %v911, %v908
    %v957 = vpack.c.bf16 %v919, %v916
    %v958 = vpack.c.bf16 %v927, %v924
    %v959 = vpack.c.bf16 %v935, %v932
    %v960 = vpack.c.bf16 %v943, %v940
    %v961 = vpack.c.bf16 %v951, %v948
    %v962 = vld [vmem:[%s7] sm:$0x1]
    %v964 = vlaneseq
    %v965 = vshrl.u32 %v964, 7
    %v966 = vsub.s32 0, %v965
    %v967 = vrot.slane %v962, %v966
    %969 = vmatprep.subr.bf16.mxu0 0
    %970 = vmatpush1.bf16.msra.mxu0 %v954
    %971 = vmatprep.subr.bf16.mxu0 0
    %972 = vmatpush1.bf16.msra.mxu0 %v955
    %973 = vmatprep.subr.bf16.mxu0 0
    %974 = vmatpush1.bf16.msra.mxu0 %v956
    %975 = vmatprep.subr.bf16.mxu0 0
    %976 = vmatpush1.bf16.msra.mxu0 %v957
    %977 = vmatprep.subr.bf16.mxu0 0
    %978 = vmatpush1.bf16.msra.mxu0 %v958
    %979 = vmatprep.subr.bf16.mxu0 0
    %980 = vmatpush1.bf16.msra.mxu0 %v959
    %981 = vmatprep.subr.bf16.mxu0 0
    %982 = vmatpush1.bf16.msra.mxu0 %v960
    %983 = vmatprep.subr.bf16.mxu0 0
    %984 = vmatpush1.bf16.msra.mxu0 %v961
    %985 = vmatprep.subr.bf16.mxu0 0
    %986 = vmatpush1.bf16.msra.mxu0 0
    %987 = vmatprep.subr.bf16.mxu0 0
    %988 = vmatpush1.bf16.msra.mxu0 0
    %989 = vmatprep.subr.bf16.mxu0 0
    %990 = vmatpush1.bf16.msra.mxu0 0
    %991 = vmatprep.subr.bf16.mxu0 0
    %992 = vmatpush1.bf16.msra.mxu0 0
    %993 = vmatprep.subr.bf16.mxu0 0
    %994 = vmatpush1.bf16.msra.mxu0 0
    %995 = vmatprep.subr.bf16.mxu0 0
    %996 = vmatpush1.bf16.msra.mxu0 0
    %997 = vmatprep.subr.bf16.mxu0 0
    %998 = vmatpush1.bf16.msra.mxu0 0
    %999 = vmatprep.subr.bf16.mxu0 0
    %1000 = vmatpush1.bf16.msra.mxu0 0
    %1001 = vmatprep.mubr.bf16.mxu0 0
    %1002 = vmatmul.mubr.bf16.gmra.mrb[0].mxu0 %v359
    %v1003 = vpop.f32.mrb[0].mxu0
    %v1004 = vadd.f32 %v967, %v1003
    %v1005 = vpop.f32.mrb[0].mxu0
    %v1006 = vpop.f32.mrb[0].mxu0
    %v1007 = vadd.f32 %v967, %v1006
    %v1008 = vpop.f32.mrb[0].mxu0
    %1009 = vmatprep.mubr.bf16.mxu0 0
    %1010 = vmatmul.mubr.bf16.gmra.mrb[0].mxu0 %v360
    %v1011 = vpop.f32.mrb[0].mxu0
    %v1012 = vadd.f32 %v967, %v1011
    %v1013 = vpop.f32.mrb[0].mxu0
    %v1014 = vpop.f32.mrb[0].mxu0
    %v1015 = vadd.f32 %v967, %v1014
    %v1016 = vpop.f32.mrb[0].mxu0
    %1017 = vmatprep.mubr.bf16.mxu0 0
    %1018 = vmatmul.mubr.bf16.gmra.mrb[0].mxu0 %v361
    %v1019 = vpop.f32.mrb[0].mxu0
    %v1020 = vadd.f32 %v967, %v1019
    %v1021 = vpop.f32.mrb[0].mxu0
    %v1022 = vpop.f32.mrb[0].mxu0
    %v1023 = vadd.f32 %v967, %v1022
    %v1024 = vpop.f32.mrb[0].mxu0
    %1025 = vmatprep.mubr.bf16.mxu0 0
    %1026 = vmatmul.mubr.bf16.gmra.mrb[0].mxu0 %v362
    %v1027 = vpop.f32.mrb[0].mxu0
    %v1028 = vadd.f32 %v967, %v1027
    %v1029 = vpop.f32.mrb[0].mxu0
    %v1030 = vpop.f32.mrb[0].mxu0
    %v1031 = vadd.f32 %v967, %v1030
    %v1032 = vpop.f32.mrb[0].mxu0
    %1033 = vmatprep.mubr.bf16.mxu0 0
    %1034 = vmatmul.mubr.bf16.gmra.mrb[0].mxu0 %v363
    %v1035 = vpop.f32.mrb[0].mxu0
    %v1036 = vadd.f32 %v967, %v1035
    %v1037 = vpop.f32.mrb[0].mxu0
    %v1038 = vpop.f32.mrb[0].mxu0
    %v1039 = vadd.f32 %v967, %v1038
    %v1040 = vpop.f32.mrb[0].mxu0
    %1041 = vmatprep.mubr.bf16.mxu0 0
    %1042 = vmatmul.mubr.bf16.gmra.mrb[0].mxu0 %v364
    %v1043 = vpop.f32.mrb[0].mxu0
    %v1044 = vadd.f32 %v967, %v1043
    %v1045 = vpop.f32.mrb[0].mxu0
    %v1046 = vpop.f32.mrb[0].mxu0
    %v1047 = vadd.f32 %v967, %v1046
    %v1048 = vpop.f32.mrb[0].mxu0
    %1049 = vmatprep.mubr.bf16.mxu0 0
    %1050 = vmatmul.mubr.bf16.gmra.mrb[0].mxu0 %v365
    %v1051 = vpop.f32.mrb[0].mxu0
    %v1052 = vadd.f32 %v967, %v1051
    %v1053 = vpop.f32.mrb[0].mxu0
    %v1054 = vpop.f32.mrb[0].mxu0
    %v1055 = vadd.f32 %v967, %v1054
    %v1056 = vpop.f32.mrb[0].mxu0
    %1057 = vmatprep.mubr.bf16.mxu0 0
    %1058 = vmatmul.mubr.bf16.gmra.mrb[0].mxu0 %v366
    %v1059 = vpop.f32.mrb[0].mxu0
    %v1060 = vadd.f32 %v967, %v1059
    %v1061 = vpop.f32.mrb[0].mxu0
    %v1062 = vpop.f32.mrb[0].mxu0
    %v1063 = vadd.f32 %v967, %v1062
    %v1064 = vpop.f32.mrb[0].mxu0
    %1065 = vdwg.mxu0
    %1066 = vst [vmem:[%s8] sm:$0xff] %v1004
    %1067 = vst [vmem:[%s8 + $0x8] sm:$0xff] %v1007
    %1068 = vst [vmem:[%s8 + $0x10] sm:$0xff] %v1012
    %1069 = vst [vmem:[%s8 + $0x18] sm:$0xff] %v1015
    %1070 = vst [vmem:[%s8 + $0x20] sm:$0xff] %v1020
    %1071 = vst [vmem:[%s8 + $0x28] sm:$0xff] %v1023
    %1072 = vst [vmem:[%s8 + $0x30] sm:$0xff] %v1028
    %1073 = vst [vmem:[%s8 + $0x38] sm:$0xff] %v1031
    %1074 = vst [vmem:[%s8 + $0x40] sm:$0xff] %v1036
    %1075 = vst [vmem:[%s8 + $0x48] sm:$0xff] %v1039
    %1076 = vst [vmem:[%s8 + $0x50] sm:$0xff] %v1044
    %1077 = vst [vmem:[%s8 + $0x58] sm:$0xff] %v1047
    %1078 = vst [vmem:[%s8 + $0x60] sm:$0xff] %v1052
    %1079 = vst [vmem:[%s8 + $0x68] sm:$0xff] %v1055
    %1080 = vst [vmem:[%s8 + $0x70] sm:$0xff] %v1060
    %1081 = vst [vmem:[%s8 + $0x78] sm:$0xff] %v1063
    // Predicated region
    $region46: #{forward.1} parent=1 // pred_check
      _
    $region47: #{forward.1} parent=1 // pred_check_branch
      %1083 = sbr.rel (0) target = $region49
    $region48: #{forward.1} parent=1 // pred_region
      _
    $region49: #{forward.1} parent=1 // pred_fallthru
      _
    // Predicated region
    $region50: #{forward.1} parent=1 // pred_check
      _
    $region51: #{forward.1} parent=1 // pred_check_branch
      %1085 = sbr.rel (0) target = $region53
    $region52: #{forward.1} parent=1 // pred_region
      _
    $region53: #{forward.1} parent=1 // pred_fallthru
      _
    %1086 = vsyncpa [#allocation3], 1
    %1087 = vsyncpa [#allocation5], 1

</llo_original>
